<compile_context>
chip_gen: v7x
topology: tpu7x:2x2x1
jax: 0.10.0
libtpu: 0.0.40
codegen_flags: <defaults>
</compile_context>

<pallas_src>
import functools

import jax
import jax.numpy as jnp
from jax.experimental import pallas as pl
from jax.experimental.pallas import tpu as pltpu

_LANE = 128
_SUBLANE = 8
_NEG_BIG = -1e30  # pad-column bias: exp underflows to exactly 0 in f32


def _round_up(x, m):
    return (x + m - 1) // m * m


def gating_kernel(x_ref, w1_ref, b1_ref, w2_ref, b2_ref, o_ref, *, ne_r):
    # x:  (Bt, in_dim)        f32
    # w1: (in_dim, hidden)    f32
    # b1: (1, hidden)         f32
    # w2: (hidden, ne_pad)    f32  (zero in pad columns)
    # b2: (1, ne_pad)         f32  (-1e30 in pad columns)
    # o:  (Bt, ne_pad)        f32  (lane-dense store)
    x = x_ref[...]
    w1 = w1_ref[...]
    w2 = w2_ref[...]
    in_dim, hidden = w1.shape

    # ---- Layer 1 on the VPU: h = tanh(x @ W1 + b1), K = in_dim (tiny) ----
    acc = b1_ref[...]                                  # (1, hidden), broadcasts
    for k in range(in_dim):                            # static unroll
        acc = acc + x[:, k:k + 1] * w1[k:k + 1, :]
    h = jnp.tanh(acc)                                  # (Bt, hidden); tanh -> EUP

    # ---- Layer 2 on the VPU: logits = h @ W2 + b2, K = hidden (tiny) ----
    logits = b2_ref[...]                               # (1, ne_pad), broadcasts
    for k in range(hidden):                            # static unroll
        logits = logits + h[:, k:k + 1] * w2[k:k + 1, :]

    # ---- Numerically-stable softmax over the expert axis ----
    # Only the first ne_r lanes participate in the cross-lane reduces: pad
    # lanes hold ~-1e30 so they cannot be the max and their exp() is exactly
    # 0, making the trimmed reduce bit-identical but with a much shorter XLU
    # rotate tree than a full 128-lane reduce.
    m = jnp.max(logits[:, :ne_r], axis=-1, keepdims=True)
    e = jnp.exp(logits - m)                            # pad lanes -> exactly 0
    denom = jnp.sum(e[:, :ne_r], axis=-1, keepdims=True)
    r = pl.reciprocal(denom, approx=True)              # EUP (free slot)
    r = r * (2.0 - denom * r)                          # Newton step -> f32 acc.
    o_ref[...] = (e * r).astype(o_ref.dtype)


def _cost_estimate(rows, in_dim, hidden, ne_pad):
    return pl.CostEstimate(
        flops=2 * rows * (in_dim * hidden + hidden * ne_pad),
        transcendentals=rows * (hidden + ne_pad),  # tanh + exp
        bytes_accessed=4 * (rows * in_dim + in_dim * hidden + hidden
                            + hidden * ne_pad + ne_pad + rows * ne_pad),
    )


def prepare_params(w1, b1, w2, b2):
    """Pad / reshape / cast the params ONCE, outside the per-call path."""
    in_dim, hidden = w1.shape
    num_experts = w2.shape[1]
    ne_pad = max(_LANE, _round_up(num_experts, _LANE))
    w1f = jnp.asarray(w1, jnp.float32)
    b1r = jnp.reshape(jnp.asarray(b1, jnp.float32), (1, hidden))
    w2p = jnp.zeros((hidden, ne_pad), jnp.float32).at[:, :num_experts].set(
        jnp.asarray(w2, jnp.float32))
    b2p = jnp.full((1, ne_pad), _NEG_BIG, jnp.float32).at[:, :num_experts].set(
        jnp.reshape(jnp.asarray(b2, jnp.float32), (1, num_experts)))
    return w1f, b1r, w2p, b2p


@functools.partial(jax.jit,
                   static_argnames=("num_experts", "batch_tile", "return_padded"))
def gating_net(x, w1f, b1r, w2p, b2p, *, num_experts, batch_tile=4096,
               return_padded=False):
    B, in_dim = x.shape
    hidden, ne_pad = w2p.shape
    ne_r = min(ne_pad, _round_up(num_experts, _SUBLANE))
    kernel = functools.partial(gating_kernel, ne_r=ne_r)
    xf = x.astype(jnp.float32)

    if B <= batch_tile:
        # Small batch: no grid -> no pipeline machinery; everything in VMEM.
        out_p = pl.pallas_call(
            kernel,
            out_shape=jax.ShapeDtypeStruct((B, ne_pad), jnp.float32),
            in_specs=[pl.BlockSpec(memory_space=pltpu.MemorySpace.VMEM)] * 5,
            out_specs=pl.BlockSpec(memory_space=pltpu.MemorySpace.VMEM),
            cost_estimate=_cost_estimate(B, in_dim, hidden, ne_pad),
        )(xf, w1f, b1r, w2p, b2p)
        out_p = out_p[:B]
        return out_p if return_padded else out_p[:, :num_experts]

    # Large batch: tile over rows, keep weights resident, parallel batch axis.
    # Always use an even number (>=2) of near-equal tiles so both v7x
    # TensorCores get balanced real work; each tile stays <= batch_tile rows.
    n_tiles = max(2, pl.cdiv(B, batch_tile))
    n_tiles += n_tiles % 2
    bt = _round_up(pl.cdiv(B, n_tiles), _SUBLANE)
    b_pad = n_tiles * bt
    if b_pad != B:
        xf = jnp.pad(xf, ((0, b_pad - B), (0, 0)))
    out_p = pl.pallas_call(
        kernel,
        out_shape=jax.ShapeDtypeStruct((b_pad, ne_pad), jnp.float32),
        grid=(n_tiles,),
        in_specs=[
            pl.BlockSpec((bt, in_dim), lambda i: (i, 0)),
            pl.BlockSpec((in_dim, hidden), lambda i: (0, 0)),
            pl.BlockSpec((1, hidden), lambda i: (0, 0)),
            pl.BlockSpec((hidden, ne_pad), lambda i: (0, 0)),
            pl.BlockSpec((1, ne_pad), lambda i: (0, 0)),
        ],
        out_specs=pl.BlockSpec((bt, ne_pad), lambda i: (i, 0)),
        compiler_params=pltpu.CompilerParams(
            dimension_semantics=("parallel",),        # shards across v7x's 2 TCs
            vmem_limit_bytes=32 * 1024 * 1024,        # safe on v5e/v6e/v7x
        ),
        cost_estimate=_cost_estimate(b_pad, in_dim, hidden, ne_pad),
    )(xf, w1f, b1r, w2p, b2p)
    out_p = out_p[:B]
    return out_p if return_padded else out_p[:, :num_experts]


def init_params(key, in_dim=2, hidden=5, num_experts=7):
    # Mimic torch.nn.Linear default init: U(-1/sqrt(fan_in), 1/sqrt(fan_in)),
    # deterministic via the provided PRNG key. Weights are [in, out].
    k1, k2, k3, k4 = jax.random.split(key, 4)
    lim1 = 1.0 / jnp.sqrt(in_dim)
    lim2 = 1.0 / jnp.sqrt(hidden)
    w1 = jax.random.uniform(k1, (in_dim, hidden), jnp.float32, -lim1, lim1)
    b1 = jax.random.uniform(k2, (1, hidden), jnp.float32, -lim1, lim1)
    w2 = jax.random.uniform(k3, (hidden, num_experts), jnp.float32, -lim2, lim2)
    b2 = jax.random.uniform(k4, (1, num_experts), jnp.float32, -lim2, lim2)
    return w1, b1, w2, b2


def gating_net_ref(x, w1, b1, w2, b2):
    h = jnp.tanh(x @ w1 + b1)
    logits = h @ w2 + b2
    return jax.nn.softmax(logits, axis=-1)


if __name__ == "__main__":
    key = jax.random.PRNGKey(0)
    kx, kp, kbig = jax.random.split(key, 3)

    B, in_dim, hidden, num_experts = 8, 2, 5, 7
    x = jax.random.normal(kx, (B, in_dim), jnp.float32)
    w1, b1, w2, b2 = init_params(kp, in_dim, hidden, num_experts)
    w1f, b1r, w2p, b2p = prepare_params(w1, b1, w2, b2)   # hoisted, done once

    # Small-batch (no-grid) path.
    out = gating_net(x, w1f, b1r, w2p, b2p, num_experts=num_experts)
    out = jax.block_until_ready(out)
    ref = gating_net_ref(x, w1, b1, w2, b2)
    assert out.shape == (B, num_experts)
    assert jnp.allclose(out, ref, atol=1e-5, rtol=1e-5)
    assert jnp.allclose(jnp.sum(out, axis=-1), 1.0, atol=1e-5)

    # Padded (lane-dense) output option: pad-lane probabilities are exactly 0.
    out_pad = jax.block_until_ready(
        gating_net(x, w1f, b1r, w2p, b2p, num_experts=num_experts,
                   return_padded=True))
    assert out_pad.shape == (B, _LANE)
    assert jnp.allclose(out_pad[:, :num_experts], ref, atol=1e-5, rtol=1e-5)
    assert jnp.all(out_pad[:, num_experts:] == 0.0)

    # Batched (tiled, parallel-grid) path, including a non-multiple-of-tile B.
    Bb = 600
    xb = jax.random.normal(kbig, (Bb, in_dim), jnp.float32)
    outb = jax.block_until_ready(
        gating_net(xb, w1f, b1r, w2p, b2p, num_experts=num_experts,
                   batch_tile=256))
    refb = gating_net_ref(xb, w1, b1, w2, b2)
    assert outb.shape == (Bb, num_experts)
    assert jnp.allclose(outb, refb, atol=1e-5, rtol=1e-5)
    assert jnp.allclose(jnp.sum(outb, axis=-1), 1.0, atol=1e-5)

    print("KERNEL_OK")
</pallas_src>

<mosaic_0001>
module attributes {stable_mosaic.version = 11 : i64} {
  func.func @gating_kernel(%arg0: memref<8x2xf32, #tpu.memory_space<vmem>>, %arg1: memref<2x5xf32, #tpu.memory_space<vmem>>, %arg2: memref<1x5xf32, #tpu.memory_space<vmem>>, %arg3: memref<5x128xf32, #tpu.memory_space<vmem>>, %arg4: memref<1x128xf32, #tpu.memory_space<vmem>>, %arg5: memref<8x128xf32, #tpu.memory_space<vmem>>) attributes {dimension_semantics = [], scalar_prefetch = 0 : i64, scratch_operands = 0 : i64, tpu.core_type = #tpu.core_type<tc>} {
    %c0 = arith.constant 0 : index
    %c0_0 = arith.constant 0 : index
    %0 = vector.load %arg0[%c0, %c0_0] : memref<8x2xf32, #tpu.memory_space<vmem>>, vector<8x2xf32>
    %c0_1 = arith.constant 0 : index
    %c0_2 = arith.constant 0 : index
    %1 = vector.load %arg1[%c0_1, %c0_2] : memref<2x5xf32, #tpu.memory_space<vmem>>, vector<2x5xf32>
    %c0_3 = arith.constant 0 : index
    %c0_4 = arith.constant 0 : index
    %2 = vector.load %arg3[%c0_3, %c0_4] : memref<5x128xf32, #tpu.memory_space<vmem>>, vector<5x128xf32>
    %c0_5 = arith.constant 0 : index
    %c0_6 = arith.constant 0 : index
    %3 = vector.load %arg2[%c0_5, %c0_6] : memref<1x5xf32, #tpu.memory_space<vmem>>, vector<1x5xf32>
    %4 = vector.extract_strided_slice %0 {offsets = [0, 0], sizes = [8, 1], strides = [1, 1]} : vector<8x2xf32> to vector<8x1xf32>
    %5 = vector.extract_strided_slice %1 {offsets = [0, 0], sizes = [1, 5], strides = [1, 1]} : vector<2x5xf32> to vector<1x5xf32>
    %6 = vector.broadcast %4 : vector<8x1xf32> to vector<8x5xf32>
    %7 = vector.broadcast %5 : vector<1x5xf32> to vector<8x5xf32>
    %8 = arith.mulf %6, %7 : vector<8x5xf32>
    %9 = vector.broadcast %3 : vector<1x5xf32> to vector<8x5xf32>
    %10 = arith.addf %9, %8 : vector<8x5xf32>
    %11 = vector.extract_strided_slice %0 {offsets = [0, 1], sizes = [8, 1], strides = [1, 1]} : vector<8x2xf32> to vector<8x1xf32>
    %12 = vector.extract_strided_slice %1 {offsets = [1, 0], sizes = [1, 5], strides = [1, 1]} : vector<2x5xf32> to vector<1x5xf32>
    %13 = vector.broadcast %11 : vector<8x1xf32> to vector<8x5xf32>
    %14 = vector.broadcast %12 : vector<1x5xf32> to vector<8x5xf32>
    %15 = arith.mulf %13, %14 : vector<8x5xf32>
    %16 = arith.addf %10, %15 : vector<8x5xf32>
    %17 = math.tanh %16 : vector<8x5xf32>
    %c0_7 = arith.constant 0 : index
    %c0_8 = arith.constant 0 : index
    %18 = vector.load %arg4[%c0_7, %c0_8] : memref<1x128xf32, #tpu.memory_space<vmem>>, vector<1x128xf32>
    %19 = vector.extract_strided_slice %17 {offsets = [0, 0], sizes = [8, 1], strides = [1, 1]} : vector<8x5xf32> to vector<8x1xf32>
    %20 = vector.extract_strided_slice %2 {offsets = [0, 0], sizes = [1, 128], strides = [1, 1]} : vector<5x128xf32> to vector<1x128xf32>
    %21 = vector.broadcast %19 : vector<8x1xf32> to vector<8x128xf32>
    %22 = vector.broadcast %20 : vector<1x128xf32> to vector<8x128xf32>
    %23 = arith.mulf %21, %22 : vector<8x128xf32>
    %24 = vector.broadcast %18 : vector<1x128xf32> to vector<8x128xf32>
    %25 = arith.addf %24, %23 : vector<8x128xf32>
    %26 = vector.extract_strided_slice %17 {offsets = [0, 1], sizes = [8, 1], strides = [1, 1]} : vector<8x5xf32> to vector<8x1xf32>
    %27 = vector.extract_strided_slice %2 {offsets = [1, 0], sizes = [1, 128], strides = [1, 1]} : vector<5x128xf32> to vector<1x128xf32>
    %28 = vector.broadcast %26 : vector<8x1xf32> to vector<8x128xf32>
    %29 = vector.broadcast %27 : vector<1x128xf32> to vector<8x128xf32>
    %30 = arith.mulf %28, %29 : vector<8x128xf32>
    %31 = arith.addf %25, %30 : vector<8x128xf32>
    %32 = vector.extract_strided_slice %17 {offsets = [0, 2], sizes = [8, 1], strides = [1, 1]} : vector<8x5xf32> to vector<8x1xf32>
    %33 = vector.extract_strided_slice %2 {offsets = [2, 0], sizes = [1, 128], strides = [1, 1]} : vector<5x128xf32> to vector<1x128xf32>
    %34 = vector.broadcast %32 : vector<8x1xf32> to vector<8x128xf32>
    %35 = vector.broadcast %33 : vector<1x128xf32> to vector<8x128xf32>
    %36 = arith.mulf %34, %35 : vector<8x128xf32>
    %37 = arith.addf %31, %36 : vector<8x128xf32>
    %38 = vector.extract_strided_slice %17 {offsets = [0, 3], sizes = [8, 1], strides = [1, 1]} : vector<8x5xf32> to vector<8x1xf32>
    %39 = vector.extract_strided_slice %2 {offsets = [3, 0], sizes = [1, 128], strides = [1, 1]} : vector<5x128xf32> to vector<1x128xf32>
    %40 = vector.broadcast %38 : vector<8x1xf32> to vector<8x128xf32>
    %41 = vector.broadcast %39 : vector<1x128xf32> to vector<8x128xf32>
    %42 = arith.mulf %40, %41 : vector<8x128xf32>
    %43 = arith.addf %37, %42 : vector<8x128xf32>
    %44 = vector.extract_strided_slice %17 {offsets = [0, 4], sizes = [8, 1], strides = [1, 1]} : vector<8x5xf32> to vector<8x1xf32>
    %45 = vector.extract_strided_slice %2 {offsets = [4, 0], sizes = [1, 128], strides = [1, 1]} : vector<5x128xf32> to vector<1x128xf32>
    %46 = vector.broadcast %44 : vector<8x1xf32> to vector<8x128xf32>
    %47 = vector.broadcast %45 : vector<1x128xf32> to vector<8x128xf32>
    %48 = arith.mulf %46, %47 : vector<8x128xf32>
    %49 = arith.addf %43, %48 : vector<8x128xf32>
    %50 = vector.extract_strided_slice %49 {offsets = [0, 0], sizes = [8, 8], strides = [1, 1]} : vector<8x128xf32> to vector<8x8xf32>
    %cst = arith.constant dense<0xFF800000> : vector<8xf32>
    %51 = vector.multi_reduction <maximumf>, %50, %cst [1] : vector<8x8xf32> to vector<8xf32>
    %52 = vector.shape_cast %51 : vector<8xf32> to vector<8x1xf32>
    %53 = vector.broadcast %52 : vector<8x1xf32> to vector<8x128xf32>
    %54 = arith.subf %49, %53 : vector<8x128xf32>
    %55 = math.exp %54 : vector<8x128xf32>
    %56 = vector.extract_strided_slice %55 {offsets = [0, 0], sizes = [8, 8], strides = [1, 1]} : vector<8x128xf32> to vector<8x8xf32>
    %cst_9 = arith.constant dense<0.000000e+00> : vector<8xf32>
    %57 = vector.multi_reduction <add>, %56, %cst_9 [1] : vector<8x8xf32> to vector<8xf32>
    %58 = vector.shape_cast %57 : vector<8xf32> to vector<8x1xf32>
    %59 = tpu.reciprocal %58 {approx = true} : vector<8x1xf32> -> vector<8x1xf32>
    %60 = arith.mulf %58, %59 : vector<8x1xf32>
    %cst_10 = arith.constant 2.000000e+00 : f32
    %61 = vector.broadcast %cst_10 : f32 to vector<8x1xf32>
    %62 = arith.subf %61, %60 : vector<8x1xf32>
    %63 = arith.mulf %59, %62 : vector<8x1xf32>
    %64 = vector.broadcast %63 : vector<8x1xf32> to vector<8x128xf32>
    %65 = arith.mulf %55, %64 : vector<8x128xf32>
    %c0_11 = arith.constant 0 : index
    %c0_12 = arith.constant 0 : index
    %66 = vector.load %arg5[%c0_11, %c0_12] : memref<8x128xf32, #tpu.memory_space<vmem>>, vector<8x128xf32>
    tpu.vector_store %arg5[%c0_11, %c0_12], %65 {strides = array<i32>} : memref<8x128xf32, #tpu.memory_space<vmem>>, vector<8x128xf32>,
    return
  }
}

</mosaic_0001>

<llo_original>
// kernel: gating_net.1
$region0: #{gating_net.1}
  #allocation0 [shape = 'u32[]', space=smem, size = 0x4, offset = 0x4, fixed_abs, tag = 'smem constant byte address 0x4 - core index']
  #allocation1 [shape = 'u32[144,128]{1,0:T(1,128)}', space=vmem, size = 0x12000, scoped, tag = 'internal scratch']
  %s0 = inlined_call_operand.vmem [shape: f32[8,2], index: 0, kind: input, shape index: {}]
  %s1 = inlined_call_operand.vmem [shape: f32[2,5], index: 1, kind: input, shape index: {}]
  %s2 = inlined_call_operand.vmem [shape: f32[1,5], index: 2, kind: input, shape index: {}]
  %s3 = inlined_call_operand.vmem [shape: f32[5,128], index: 3, kind: input, shape index: {}]
  %s4 = inlined_call_operand.vmem [shape: f32[1,128], index: 4, kind: input, shape index: {}]
  %s5 = inlined_call_operand.hbm [shape: f32[8,128], index: 5, kind: output, shape index: {}]
  %s6 = sld [smem:[#allocation0]]
  $region30: #{gating_net.1} parent=0
    _
  %s8 = ssub.s32 1, %s6
  %s9 = scalar_select 0, %s8, %s6
  $region1: #{gating_net.1} parent=0
    #allocation2 [shape = 'u8[4096]{0}', space=vmem, size = 0x1000, scoped, tag = 'output window, operand 0, single buffered']
    #allocation3 [shape = 's32[1]{0}', space=sflag, size = 0x4, scoped, tag = 'scoped memory for gating_net.1']
    %10 = vsyncpa [#allocation3], 0
    // Predicated region
    $region2: #{gating_net.1} parent=1 // pred_check
      _
    $region3: #{gating_net.1} parent=1 // pred_check_branch
      %12 = sbr.rel (0) target = $region5
    $region4: #{gating_net.1} parent=1 // pred_region
      _
    $region5: #{gating_net.1} parent=1 // pred_fallthru
      _
    // Predicated region
    $region6: #{gating_net.1} parent=1 // pred_check
      _
    $region7: #{gating_net.1} parent=1 // pred_check_branch
      %14 = sbr.rel (0) target = $region9
    $region8: #{gating_net.1} parent=1 // pred_region
      _
    $region9: #{gating_net.1} parent=1 // pred_fallthru
      _
    // Predicated region
    $region10: #{gating_net.1} parent=1 // pred_check
      _
    $region11: #{gating_net.1} parent=1 // pred_check_branch
      %16 = sbr.rel (0) target = $region13
    $region12: #{gating_net.1} parent=1 // pred_region
      _
    $region13: #{gating_net.1} parent=1 // pred_fallthru
      _
    // Predicated region
    $region14: #{gating_net.1} parent=1 // pred_check
      _
    $region15: #{gating_net.1} parent=1 // pred_check_branch
      %18 = sbr.rel (0) target = $region17
    $region16: #{gating_net.1} parent=1 // pred_region
      _
    $region17: #{gating_net.1} parent=1 // pred_fallthru
      _
    // Predicated region
    $region18: #{gating_net.1} parent=1 // pred_check
      _
    $region19: #{gating_net.1} parent=1 // pred_check_branch
      %20 = sbr.rel (0) target = $region21
    $region20: #{gating_net.1} parent=1 // pred_region
      _
    $region21: #{gating_net.1} parent=1 // pred_fallthru
      _
    %v21 = vld [vmem:[%s0] sm:$0xff]
    %v22 = vld [vmem:[%s1] sm:$0x3]
    %v23 = vld [vmem:[%s3] sm:$0x1f]
    %v24 = vld [vmem:[%s2] sm:$0x1]
    %26 = vset.pattern.permute.xlu0 0
    %27 = vperm.xlu0 %26, %v21
    %v28 = vpop.permute.xlu0 %27
    %v30 = vlaneseq
    %v31 = vshrl.u32 %v30, 7
    %v32 = vsub.s32 0, %v31
    %v33 = vrot.slane %v22, %v32
    %v34 = vmul.f32 %v28, %v33
    %v36 = vlaneseq
    %v37 = vshrl.u32 %v36, 7
    %v38 = vsub.s32 0, %v37
    %v39 = vrot.slane %v24, %v38
    %v41 = vadd.f32 %v39, %v34
    %42 = vset.pattern.permute.xlu0 1
    %43 = vperm.xlu0 %42, %v21
    %v44 = vpop.permute.xlu0 %43
    %v46 = vlaneseq
    %v47 = vshrl.u32 %v46, 7
    %v48 = vsub.s32 1, %v47
    %v49 = vrot.slane %v22, %v48
    %v50 = vmul.f32 %v44, %v49
    %v51 = vadd.f32 %v41, %v50
    %v52 = vtanh.pop %v51
    %v53 = vld [vmem:[%s4] sm:$0x1]
    %55 = vset.pattern.permute.xlu0 0
    %56 = vperm.xlu0 %55, %v52
    %v57 = vpop.permute.xlu0 %56
    %v59 = vlaneseq
    %v60 = vshrl.u32 %v59, 7
    %v61 = vsub.s32 0, %v60
    %v62 = vrot.slane %v23, %v61
    %v63 = vmul.f32 %v57, %v62
    %v65 = vlaneseq
    %v66 = vshrl.u32 %v65, 7
    %v67 = vsub.s32 0, %v66
    %v68 = vrot.slane %v53, %v67
    %v70 = vadd.f32 %v68, %v63
    %71 = vset.pattern.permute.xlu0 1
    %72 = vperm.xlu0 %71, %v52
    %v73 = vpop.permute.xlu0 %72
    %v75 = vlaneseq
    %v76 = vshrl.u32 %v75, 7
    %v77 = vsub.s32 1, %v76
    %v78 = vrot.slane %v23, %v77
    %v79 = vmul.f32 %v73, %v78
    %v80 = vadd.f32 %v70, %v79
    %81 = vset.pattern.permute.xlu0 2
    %82 = vperm.xlu0 %81, %v52
    %v83 = vpop.permute.xlu0 %82
    %v85 = vlaneseq
    %v86 = vshrl.u32 %v85, 7
    %v87 = vsub.s32 2, %v86
    %v88 = vrot.slane %v23, %v87
    %v89 = vmul.f32 %v83, %v88
    %v90 = vadd.f32 %v80, %v89
    %91 = vset.pattern.permute.xlu0 3
    %92 = vperm.xlu0 %91, %v52
    %v93 = vpop.permute.xlu0 %92
    %v95 = vlaneseq
    %v96 = vshrl.u32 %v95, 7
    %v97 = vsub.s32 3, %v96
    %v98 = vrot.slane %v23, %v97
    %v99 = vmul.f32 %v93, %v98
    %v100 = vadd.f32 %v90, %v99
    %101 = vset.pattern.permute.xlu0 4
    %102 = vperm.xlu0 %101, %v52
    %v103 = vpop.permute.xlu0 %102
    %v105 = vlaneseq
    %v106 = vshrl.u32 %v105, 7
    %v107 = vsub.s32 4, %v106
    %v108 = vrot.slane %v23, %v107
    %v109 = vmul.f32 %v103, %v108
    %v110 = vadd.f32 %v100, %v109
    %vm111 = vcmask 64512
    %v112 = vsel %vm111, %v110, -inf
    %113 = vmax.xlane.f32.xlu0 %v112
    %v114 = vpop.xlane.xlu0 %113
    %v115 = vsub.f32 %v110, %v114
    %v116 = vmul.f32 %v115, 1.442695
    %v117 = vpow.pop %v116
    %v118 = vsel %vm111, %v117, 0.0
    %119 = vadd.xlane.f32.xlu0 %v118
    %v120 = vpop.xlane.xlu0 %119
    %v121 = vrcp.pop %v120
    %v122 = vmul.f32 %v120, %v121
    %v123 = vsub.f32 2.0, %v122
    %v124 = vmul.f32 %v121, %v123
    %v125 = vmul.f32 %v117, %v124
    %126 = vst [vmem:[#allocation2] sm:$0xff] %v125
    // Predicated region
    $region22: #{gating_net.1} parent=1 // pred_check
      _
    $region23: #{gating_net.1} parent=1 // pred_check_branch
      %128 = sbr.rel (0) target = $region25
    $region24: #{gating_net.1} parent=1 // pred_region
      %s130 = ssub.s32 128, 128
      %131 = vsyncadd [#allocation3], %s130
      %s133 = sshll.u32 [#allocation2], 4
      %s134 = int_to_ptr.vmem [resolvable:$true] %s133
      %136 = dma.vmem_to_hbm [thread:$0]  %s134, 128, %s5, [#allocation3]
    $region25: #{gating_net.1} parent=1 // pred_fallthru
      _
    // Predicated region
    $region26: #{gating_net.1} parent=1 // pred_check
      _
    $region27: #{gating_net.1} parent=1 // pred_check_branch
      %138 = sbr.rel (0) target = $region29
    $region28: #{gating_net.1} parent=1 // pred_region
      %139 = dma.done [#allocation3], 128
    $region29: #{gating_net.1} parent=1 // pred_fallthru
      _
    %140 = vsyncpa [#allocation3], 1

</llo_original>
